<compile_context>
chip_gen: v6e
topology: v6e:2x2x1
jax: 0.10.0
libtpu: 0.0.40
codegen_flags: <defaults>
</compile_context>

<pallas_src>
import jax
import jax.numpy as jnp
from jax.experimental import pallas as pl
from jax.experimental.pallas import tpu as pltpu


# ------------------------------ fused kernel ----------------------------------
def topic_segment_kernel(x_ref, w_ref, b_ref, tags_ref, mask_ref,
                         start_ref, end_ref, trans_ref,
                         logits_ref, loss_ref,
                         emis0_scr, emis1_scr):
    # x:      (B, S, D) VMEM
    # w:      (2, D)    VMEM   (torch nn.Linear weight layout: (out, in))
    # b:      (2,)      SMEM
    # tags:   (S, B)    VMEM   float {0,1}, time-major
    # mask:   (S, B)    VMEM   float {0,1}, time-major
    # start/end: (2,) SMEM ; trans: (2,2) SMEM
    # logits: (B, S, 2) VMEM out ; loss: (1,1) VMEM out = -sum(loglik)
    # emis0_scr / emis1_scr: (S, B) f32 VMEM scratch (time-major emissions)
    B, S, D = x_ref.shape

    # ---- classifier on the VPU: logits[b, s, k] = <x[b, s, :], w[k, :]> + b[k] ----
    w0 = w_ref[0:1, :].astype(jnp.float32)            # (1, D), lane axis = D
    w1 = w_ref[1:2, :].astype(jnp.float32)
    b0 = b_ref[0]
    b1 = b_ref[1]
    for b in range(B):                                 # static unroll, B is small
        xb = x_ref[b].astype(jnp.float32)              # (S, D)
        e0 = jnp.sum(xb * w0, axis=-1, keepdims=True) + b0    # (S, 1)
        e1 = jnp.sum(xb * w1, axis=-1, keepdims=True) + b1    # (S, 1)
        emis0_scr[:, b:b + 1] = e0                     # time-major emissions for CRF
        emis1_scr[:, b:b + 1] = e1
        logits_ref[b, :, 0:1] = e0                     # module-facing (B, S, 2) output
        logits_ref[b, :, 1:2] = e1

    # ---- CRF scalars from SMEM ----
    s0 = start_ref[0]
    s1 = start_ref[1]
    end0 = end_ref[0]
    end1 = end_ref[1]
    t00 = trans_ref[0, 0]
    t01 = trans_ref[0, 1]
    t10 = trans_ref[1, 0]
    t11 = trans_ref[1, 1]

    emis0 = emis0_scr[...]                             # (S, B)
    emis1 = emis1_scr[...]
    tags = tags_ref[...]                               # (S, B)
    mask = mask_ref[...]                               # (S, B)

    # ---- numerator: score of the given tag sequence ----
    emis_at_tag = emis0 * (1.0 - tags) + emis1 * tags                  # (S, B)
    tag0 = tags[0:1, :]                                                # (1, B)
    num = s0 * (1.0 - tag0) + s1 * tag0 + emis_at_tag[0:1, :]          # (1, B)

    prev = tags[:-1, :]
    cur = tags[1:, :]
    m_rest = mask[1:, :]
    trans_val = (t00 * (1.0 - prev) * (1.0 - cur)
                 + t01 * (1.0 - prev) * cur
                 + t10 * prev * (1.0 - cur)
                 + t11 * prev * cur)
    num = num + jnp.sum(m_rest * (trans_val + emis_at_tag[1:, :]),
                        axis=0, keepdims=True)                         # (1, B)

    # last tag of each sequence via mask-difference (contiguous masks):
    #   last_tag = sum_t tags[t] * (mask[t] - mask[t+1]),  mask[S] := 0
    last_tag = (jnp.sum(tags * mask, axis=0, keepdims=True)
                - jnp.sum(prev * m_rest, axis=0, keepdims=True))       # (1, B)
    num = num + end0 * (1.0 - last_tag) + end1 * last_tag

    # ---- denominator: log-partition via the forward algorithm ----
    # Hoisted per-lane constants: no broadcast_in_dim inside the serial loop.
    T00 = jnp.exp(jnp.full((1, B), t00, jnp.float32))
    T01 = jnp.exp(jnp.full((1, B), t01, jnp.float32))
    T10 = jnp.exp(jnp.full((1, B), t10, jnp.float32))
    T11 = jnp.exp(jnp.full((1, B), t11, jnp.float32))

    a0 = s0 + emis0[0:1, :]                                            # (1, B)
    a1 = s1 + emis1[0:1, :]

    def body(t, carry):
        a0, a1 = carry
        et0 = emis0_scr[pl.ds(t, 1), :]                                # (1, B)
        et1 = emis1_scr[pl.ds(t, 1), :]
        mt = mask_ref[pl.ds(t, 1), :]
        m = jnp.maximum(a0, a1)
        ea0 = jnp.exp(a0 - m)            # shared by both target states
        ea1 = jnp.exp(a1 - m)
        n0 = m + jnp.log(ea0 * T00 + ea1 * T10) + et0
        n1 = m + jnp.log(ea0 * T01 + ea1 * T11) + et1
        keep = mt > 0.0
        return jnp.where(keep, n0, a0), jnp.where(keep, n1, a1)

    unroll = True if S <= 64 else 8
    a0, a1 = jax.lax.fori_loop(1, S, body, (a0, a1), unroll=unroll)
    denom = jnp.logaddexp(a0 + end0, a1 + end1)                        # (1, B)

    llh = jnp.sum(num - denom, axis=1, keepdims=True)                  # (1, 1)
    loss_ref[...] = -llh


# ------------------------------ module wrapper --------------------------------
def topic_segment_forward(x, labels, labels_mask, params):
    """Mirrors TopicSegment.forward with crf_decode=None:
       returns (-crf_log_likelihood_sum, logits)."""
    B, S, D = x.shape
    # dropout: eval-mode identity
    tags_t = jnp.transpose(labels).astype(jnp.float32)        # (S, B) — tiny
    mask_t = jnp.transpose(labels_mask).astype(jnp.float32)   # (S, B) — tiny

    vmem = pl.BlockSpec(memory_space=pltpu.MemorySpace.VMEM)
    smem = pl.BlockSpec(memory_space=pltpu.MemorySpace.SMEM)

    logits, loss = pl.pallas_call(
        topic_segment_kernel,
        out_shape=(jax.ShapeDtypeStruct((B, S, 2), jnp.float32),
                   jax.ShapeDtypeStruct((1, 1), jnp.float32)),
        in_specs=[vmem, vmem, smem, vmem, vmem, smem, smem, smem],
        out_specs=(vmem, vmem),
        scratch_shapes=[pltpu.VMEM((S, B), jnp.float32),
                        pltpu.VMEM((S, B), jnp.float32)],
        compiler_params=pltpu.CompilerParams(vmem_limit_bytes=32 * 1024 * 1024),
    )(x, params["w"], params["b"], tags_t, mask_t,
      params["start_transitions"], params["end_transitions"],
      params["transitions"])
    return loss[0, 0], logits


# ------------------------- pure-JAX reference (check) --------------------------
def _reference(x, labels, mask, params):
    logits = jnp.einsum("bsd,kd->bsk", x, params["w"]) + params["b"]
    start = params["start_transitions"]
    end = params["end_transitions"]
    trans = params["transitions"]
    maskf = mask.astype(jnp.float32)
    B, S, _ = logits.shape
    bidx = jnp.arange(B)
    # numerator
    score = start[labels[:, 0]] + logits[bidx, 0, labels[:, 0]]
    for t in range(1, S):
        step = trans[labels[:, t - 1], labels[:, t]] + logits[bidx, t, labels[:, t]]
        score = score + maskf[:, t] * step
    seq_len = jnp.sum(mask, axis=1)
    last_tag = labels[bidx, seq_len - 1]
    score = score + end[last_tag]
    # denominator
    alpha = start[None, :] + logits[:, 0, :]
    for t in range(1, S):
        nxt = jax.nn.logsumexp(alpha[:, :, None] + trans[None, :, :], axis=1) + logits[:, t, :]
        alpha = jnp.where(maskf[:, t][:, None] > 0, nxt, alpha)
    denom = jax.nn.logsumexp(alpha + end[None, :], axis=1)
    return -jnp.sum(score - denom), logits


if __name__ == "__main__":
    B, S, D = 2, 8, 32
    key = jax.random.PRNGKey(0)
    k = jax.random.split(key, 8)

    x = jax.random.normal(k[0], (B, S, D), jnp.float32)
    labels = jax.random.randint(k[1], (B, S), 0, 2).astype(jnp.int32)
    lengths = jnp.array([S, 5], jnp.int32)
    labels_mask = (jnp.arange(S)[None, :] < lengths[:, None]).astype(jnp.int32)

    params = {
        # nn.Linear(transformer_embed_dim, 2): torch weight layout (out, in) = (2, D)
        "w": jax.random.uniform(k[2], (2, D), jnp.float32,
                                minval=-1.0 / jnp.sqrt(D), maxval=1.0 / jnp.sqrt(D)),
        "b": jax.random.uniform(k[3], (2,), jnp.float32,
                                minval=-1.0 / jnp.sqrt(D), maxval=1.0 / jnp.sqrt(D)),
        # torchcrf.CRF(num_tags=2): uniform(-0.1, 0.1)
        "start_transitions": jax.random.uniform(k[4], (2,), jnp.float32, -0.1, 0.1),
        "end_transitions": jax.random.uniform(k[5], (2,), jnp.float32, -0.1, 0.1),
        "transitions": jax.random.uniform(k[6], (2, 2), jnp.float32, -0.1, 0.1),
    }

    fwd = jax.jit(topic_segment_forward)
    neg_loss, logits = fwd(x, labels, labels_mask, params)
    neg_loss = jax.block_until_ready(neg_loss)
    logits = jax.block_until_ready(logits)

    assert logits.shape == (B, S, 2)
    assert bool(jnp.isfinite(neg_loss))
    assert bool(jnp.all(jnp.isfinite(logits)))

    ref_loss, ref_logits = _reference(x, labels, labels_mask, params)
    assert bool(jnp.allclose(logits, ref_logits, rtol=1e-4, atol=1e-3))
    assert bool(jnp.allclose(neg_loss, ref_loss, rtol=1e-4, atol=1e-3))

    print("KERNEL_OK")
</pallas_src>

<mosaic_0001>
module attributes {stable_mosaic.version = 11 : i64} {
  func.func @topic_segment_kernel(%arg0: memref<2x8x32xf32, #tpu.memory_space<vmem>>, %arg1: memref<2x32xf32, #tpu.memory_space<vmem>>, %arg2: memref<2xf32, #tpu.memory_space<smem>>, %arg3: memref<8x2xf32, #tpu.memory_space<vmem>>, %arg4: memref<8x2xf32, #tpu.memory_space<vmem>>, %arg5: memref<2xf32, #tpu.memory_space<smem>>, %arg6: memref<2xf32, #tpu.memory_space<smem>>, %arg7: memref<2x2xf32, #tpu.memory_space<smem>>, %arg8: memref<2x8x2xf32, #tpu.memory_space<vmem>>, %arg9: memref<1x1xf32, #tpu.memory_space<vmem>>, %arg10: memref<8x2xf32, #tpu.memory_space<vmem>>, %arg11: memref<8x2xf32, #tpu.memory_space<vmem>>) attributes {dimension_semantics = [], scalar_prefetch = 0 : i64, scratch_operands = 2 : i64, tpu.core_type = #tpu.core_type<tc>} {
    %c0 = arith.constant 0 : index
    %c0_0 = arith.constant 0 : index
    %0 = vector.load %arg1[%c0, %c0_0] : memref<2x32xf32, #tpu.memory_space<vmem>>, vector<1x32xf32>
    %c1 = arith.constant 1 : index
    %c0_1 = arith.constant 0 : index
    %1 = vector.load %arg1[%c1, %c0_1] : memref<2x32xf32, #tpu.memory_space<vmem>>, vector<1x32xf32>
    %c0_2 = arith.constant 0 : index
    %2 = memref.load %arg2[%c0_2] : memref<2xf32, #tpu.memory_space<smem>>
    %c1_3 = arith.constant 1 : index
    %3 = memref.load %arg2[%c1_3] : memref<2xf32, #tpu.memory_space<smem>>
    %c0_4 = arith.constant 0 : index
    %c0_5 = arith.constant 0 : index
    %c0_6 = arith.constant 0 : index
    %4 = vector.load %arg0[%c0_4, %c0_5, %c0_6] : memref<2x8x32xf32, #tpu.memory_space<vmem>>, vector<1x8x32xf32>
    %5 = vector.shape_cast %4 : vector<1x8x32xf32> to vector<8x32xf32>
    %6 = vector.broadcast %0 : vector<1x32xf32> to vector<8x32xf32>
    %7 = arith.mulf %5, %6 : vector<8x32xf32>
    %cst = arith.constant dense<0.000000e+00> : vector<8xf32>
    %8 = vector.multi_reduction <add>, %7, %cst [1] : vector<8x32xf32> to vector<8xf32>
    %9 = vector.shape_cast %8 : vector<8xf32> to vector<8x1xf32>
    %10 = vector.broadcast %2 : f32 to vector<8x1xf32>
    %11 = arith.addf %9, %10 : vector<8x1xf32>
    %12 = vector.broadcast %1 : vector<1x32xf32> to vector<8x32xf32>
    %13 = arith.mulf %5, %12 : vector<8x32xf32>
    %cst_7 = arith.constant dense<0.000000e+00> : vector<8xf32>
    %14 = vector.multi_reduction <add>, %13, %cst_7 [1] : vector<8x32xf32> to vector<8xf32>
    %15 = vector.shape_cast %14 : vector<8xf32> to vector<8x1xf32>
    %16 = vector.broadcast %3 : f32 to vector<8x1xf32>
    %17 = arith.addf %15, %16 : vector<8x1xf32>
    %c0_8 = arith.constant 0 : index
    %c0_9 = arith.constant 0 : index
    %18 = vector.load %arg10[%c0_8, %c0_9] : memref<8x2xf32, #tpu.memory_space<vmem>>, vector<8x1xf32>
    tpu.vector_store %arg10[%c0_8, %c0_9], %11 {strides = array<i32>} : memref<8x2xf32, #tpu.memory_space<vmem>>, vector<8x1xf32>,
    %c0_10 = arith.constant 0 : index
    %c0_11 = arith.constant 0 : index
    %19 = vector.load %arg11[%c0_10, %c0_11] : memref<8x2xf32, #tpu.memory_space<vmem>>, vector<8x1xf32>
    tpu.vector_store %arg11[%c0_10, %c0_11], %17 {strides = array<i32>} : memref<8x2xf32, #tpu.memory_space<vmem>>, vector<8x1xf32>,
    %c0_12 = arith.constant 0 : index
    %c0_13 = arith.constant 0 : index
    %c0_14 = arith.constant 0 : index
    %20 = vector.load %arg8[%c0_12, %c0_13, %c0_14] : memref<2x8x2xf32, #tpu.memory_space<vmem>>, vector<1x8x1xf32>
    %21 = vector.shape_cast %20 : vector<1x8x1xf32> to vector<8x1xf32>
    %22 = vector.shape_cast %11 : vector<8x1xf32> to vector<1x8x1xf32>
    tpu.vector_store %arg8[%c0_12, %c0_13, %c0_14], %22 {strides = array<i32>} : memref<2x8x2xf32, #tpu.memory_space<vmem>>, vector<1x8x1xf32>,
    %c0_15 = arith.constant 0 : index
    %c0_16 = arith.constant 0 : index
    %c1_17 = arith.constant 1 : index
    %23 = vector.load %arg8[%c0_15, %c0_16, %c1_17] : memref<2x8x2xf32, #tpu.memory_space<vmem>>, vector<1x8x1xf32>
    %24 = vector.shape_cast %23 : vector<1x8x1xf32> to vector<8x1xf32>
    %25 = vector.shape_cast %17 : vector<8x1xf32> to vector<1x8x1xf32>
    tpu.vector_store %arg8[%c0_15, %c0_16, %c1_17], %25 {strides = array<i32>} : memref<2x8x2xf32, #tpu.memory_space<vmem>>, vector<1x8x1xf32>,
    %c1_18 = arith.constant 1 : index
    %c0_19 = arith.constant 0 : index
    %c0_20 = arith.constant 0 : index
    %26 = vector.load %arg0[%c1_18, %c0_19, %c0_20] : memref<2x8x32xf32, #tpu.memory_space<vmem>>, vector<1x8x32xf32>
    %27 = vector.shape_cast %26 : vector<1x8x32xf32> to vector<8x32xf32>
    %28 = vector.broadcast %0 : vector<1x32xf32> to vector<8x32xf32>
    %29 = arith.mulf %27, %28 : vector<8x32xf32>
    %cst_21 = arith.constant dense<0.000000e+00> : vector<8xf32>
    %30 = vector.multi_reduction <add>, %29, %cst_21 [1] : vector<8x32xf32> to vector<8xf32>
    %31 = vector.shape_cast %30 : vector<8xf32> to vector<8x1xf32>
    %32 = vector.broadcast %2 : f32 to vector<8x1xf32>
    %33 = arith.addf %31, %32 : vector<8x1xf32>
    %34 = vector.broadcast %1 : vector<1x32xf32> to vector<8x32xf32>
    %35 = arith.mulf %27, %34 : vector<8x32xf32>
    %cst_22 = arith.constant dense<0.000000e+00> : vector<8xf32>
    %36 = vector.multi_reduction <add>, %35, %cst_22 [1] : vector<8x32xf32> to vector<8xf32>
    %37 = vector.shape_cast %36 : vector<8xf32> to vector<8x1xf32>
    %38 = vector.broadcast %3 : f32 to vector<8x1xf32>
    %39 = arith.addf %37, %38 : vector<8x1xf32>
    %c0_23 = arith.constant 0 : index
    %c1_24 = arith.constant 1 : index
    %40 = vector.load %arg10[%c0_23, %c1_24] : memref<8x2xf32, #tpu.memory_space<vmem>>, vector<8x1xf32>
    tpu.vector_store %arg10[%c0_23, %c1_24], %33 {strides = array<i32>} : memref<8x2xf32, #tpu.memory_space<vmem>>, vector<8x1xf32>,
    %c0_25 = arith.constant 0 : index
    %c1_26 = arith.constant 1 : index
    %41 = vector.load %arg11[%c0_25, %c1_26] : memref<8x2xf32, #tpu.memory_space<vmem>>, vector<8x1xf32>
    tpu.vector_store %arg11[%c0_25, %c1_26], %39 {strides = array<i32>} : memref<8x2xf32, #tpu.memory_space<vmem>>, vector<8x1xf32>,
    %c1_27 = arith.constant 1 : index
    %c0_28 = arith.constant 0 : index
    %c0_29 = arith.constant 0 : index
    %42 = vector.load %arg8[%c1_27, %c0_28, %c0_29] : memref<2x8x2xf32, #tpu.memory_space<vmem>>, vector<1x8x1xf32>
    %43 = vector.shape_cast %42 : vector<1x8x1xf32> to vector<8x1xf32>
    %44 = vector.shape_cast %33 : vector<8x1xf32> to vector<1x8x1xf32>
    tpu.vector_store %arg8[%c1_27, %c0_28, %c0_29], %44 {strides = array<i32>} : memref<2x8x2xf32, #tpu.memory_space<vmem>>, vector<1x8x1xf32>,
    %c1_30 = arith.constant 1 : index
    %c0_31 = arith.constant 0 : index
    %c1_32 = arith.constant 1 : index
    %45 = vector.load %arg8[%c1_30, %c0_31, %c1_32] : memref<2x8x2xf32, #tpu.memory_space<vmem>>, vector<1x8x1xf32>
    %46 = vector.shape_cast %45 : vector<1x8x1xf32> to vector<8x1xf32>
    %47 = vector.shape_cast %39 : vector<8x1xf32> to vector<1x8x1xf32>
    tpu.vector_store %arg8[%c1_30, %c0_31, %c1_32], %47 {strides = array<i32>} : memref<2x8x2xf32, #tpu.memory_space<vmem>>, vector<1x8x1xf32>,
    %c0_33 = arith.constant 0 : index
    %48 = memref.load %arg5[%c0_33] : memref<2xf32, #tpu.memory_space<smem>>
    %c1_34 = arith.constant 1 : index
    %49 = memref.load %arg5[%c1_34] : memref<2xf32, #tpu.memory_space<smem>>
    %c0_35 = arith.constant 0 : index
    %50 = memref.load %arg6[%c0_35] : memref<2xf32, #tpu.memory_space<smem>>
    %c1_36 = arith.constant 1 : index
    %51 = memref.load %arg6[%c1_36] : memref<2xf32, #tpu.memory_space<smem>>
    %c0_37 = arith.constant 0 : index
    %c0_38 = arith.constant 0 : index
    %52 = memref.load %arg7[%c0_37, %c0_38] : memref<2x2xf32, #tpu.memory_space<smem>>
    %c0_39 = arith.constant 0 : index
    %c1_40 = arith.constant 1 : index
    %53 = memref.load %arg7[%c0_39, %c1_40] : memref<2x2xf32, #tpu.memory_space<smem>>
    %c1_41 = arith.constant 1 : index
    %c0_42 = arith.constant 0 : index
    %54 = memref.load %arg7[%c1_41, %c0_42] : memref<2x2xf32, #tpu.memory_space<smem>>
    %c1_43 = arith.constant 1 : index
    %c1_44 = arith.constant 1 : index
    %55 = memref.load %arg7[%c1_43, %c1_44] : memref<2x2xf32, #tpu.memory_space<smem>>
    %c0_45 = arith.constant 0 : index
    %c0_46 = arith.constant 0 : index
    %56 = vector.load %arg10[%c0_45, %c0_46] : memref<8x2xf32, #tpu.memory_space<vmem>>, vector<8x2xf32>
    %c0_47 = arith.constant 0 : index
    %c0_48 = arith.constant 0 : index
    %57 = vector.load %arg11[%c0_47, %c0_48] : memref<8x2xf32, #tpu.memory_space<vmem>>, vector<8x2xf32>
    %c0_49 = arith.constant 0 : index
    %c0_50 = arith.constant 0 : index
    %58 = vector.load %arg3[%c0_49, %c0_50] : memref<8x2xf32, #tpu.memory_space<vmem>>, vector<8x2xf32>
    %c0_51 = arith.constant 0 : index
    %c0_52 = arith.constant 0 : index
    %59 = vector.load %arg4[%c0_51, %c0_52] : memref<8x2xf32, #tpu.memory_space<vmem>>, vector<8x2xf32>
    %cst_53 = arith.constant 1.000000e+00 : f32
    %60 = vector.broadcast %cst_53 : f32 to vector<8x2xf32>
    %61 = arith.subf %60, %58 : vector<8x2xf32>
    %62 = arith.mulf %56, %61 : vector<8x2xf32>
    %63 = arith.mulf %57, %58 : vector<8x2xf32>
    %64 = arith.addf %62, %63 : vector<8x2xf32>
    %65 = vector.extract_strided_slice %58 {offsets = [0, 0], sizes = [1, 2], strides = [1, 1]} : vector<8x2xf32> to vector<1x2xf32>
    %cst_54 = arith.constant 1.000000e+00 : f32
    %66 = vector.broadcast %cst_54 : f32 to vector<1x2xf32>
    %67 = arith.subf %66, %65 : vector<1x2xf32>
    %68 = vector.broadcast %48 : f32 to vector<1x2xf32>
    %69 = arith.mulf %68, %67 : vector<1x2xf32>
    %70 = vector.broadcast %49 : f32 to vector<1x2xf32>
    %71 = arith.mulf %70, %65 : vector<1x2xf32>
    %72 = arith.addf %69, %71 : vector<1x2xf32>
    %73 = vector.extract_strided_slice %64 {offsets = [0, 0], sizes = [1, 2], strides = [1, 1]} : vector<8x2xf32> to vector<1x2xf32>
    %74 = arith.addf %72, %73 : vector<1x2xf32>
    %75 = vector.extract_strided_slice %58 {offsets = [0, 0], sizes = [7, 2], strides = [1, 1]} : vector<8x2xf32> to vector<7x2xf32>
    %76 = vector.extract_strided_slice %58 {offsets = [1, 0], sizes = [7, 2], strides = [1, 1]} : vector<8x2xf32> to vector<7x2xf32>
    %77 = vector.extract_strided_slice %59 {offsets = [1, 0], sizes = [7, 2], strides = [1, 1]} : vector<8x2xf32> to vector<7x2xf32>
    %cst_55 = arith.constant 1.000000e+00 : f32
    %78 = vector.broadcast %cst_55 : f32 to vector<7x2xf32>
    %79 = arith.subf %78, %75 : vector<7x2xf32>
    %80 = vector.broadcast %52 : f32 to vector<7x2xf32>
    %81 = arith.mulf %80, %79 : vector<7x2xf32>
    %cst_56 = arith.constant 1.000000e+00 : f32
    %82 = vector.broadcast %cst_56 : f32 to vector<7x2xf32>
    %83 = arith.subf %82, %76 : vector<7x2xf32>
    %84 = arith.mulf %81, %83 : vector<7x2xf32>
    %cst_57 = arith.constant 1.000000e+00 : f32
    %85 = vector.broadcast %cst_57 : f32 to vector<7x2xf32>
    %86 = arith.subf %85, %75 : vector<7x2xf32>
    %87 = vector.broadcast %53 : f32 to vector<7x2xf32>
    %88 = arith.mulf %87, %86 : vector<7x2xf32>
    %89 = arith.mulf %88, %76 : vector<7x2xf32>
    %90 = arith.addf %84, %89 : vector<7x2xf32>
    %91 = vector.broadcast %54 : f32 to vector<7x2xf32>
    %92 = arith.mulf %91, %75 : vector<7x2xf32>
    %cst_58 = arith.constant 1.000000e+00 : f32
    %93 = vector.broadcast %cst_58 : f32 to vector<7x2xf32>
    %94 = arith.subf %93, %76 : vector<7x2xf32>
    %95 = arith.mulf %92, %94 : vector<7x2xf32>
    %96 = arith.addf %90, %95 : vector<7x2xf32>
    %97 = vector.broadcast %55 : f32 to vector<7x2xf32>
    %98 = arith.mulf %97, %75 : vector<7x2xf32>
    %99 = arith.mulf %98, %76 : vector<7x2xf32>
    %100 = arith.addf %96, %99 : vector<7x2xf32>
    %101 = vector.extract_strided_slice %64 {offsets = [1, 0], sizes = [7, 2], strides = [1, 1]} : vector<8x2xf32> to vector<7x2xf32>
    %102 = arith.addf %100, %101 : vector<7x2xf32>
    %103 = arith.mulf %77, %102 : vector<7x2xf32>
    %cst_59 = arith.constant dense<0.000000e+00> : vector<2xf32>
    %104 = vector.multi_reduction <add>, %103, %cst_59 [0] : vector<7x2xf32> to vector<2xf32>
    %105 = vector.shape_cast %104 : vector<2xf32> to vector<1x2xf32>
    %106 = arith.addf %74, %105 : vector<1x2xf32>
    %107 = arith.mulf %58, %59 : vector<8x2xf32>
    %cst_60 = arith.constant dense<0.000000e+00> : vector<2xf32>
    %108 = vector.multi_reduction <add>, %107, %cst_60 [0] : vector<8x2xf32> to vector<2xf32>
    %109 = vector.shape_cast %108 : vector<2xf32> to vector<1x2xf32>
    %110 = arith.mulf %75, %77 : vector<7x2xf32>
    %cst_61 = arith.constant dense<0.000000e+00> : vector<2xf32>
    %111 = vector.multi_reduction <add>, %110, %cst_61 [0] : vector<7x2xf32> to vector<2xf32>
    %112 = vector.shape_cast %111 : vector<2xf32> to vector<1x2xf32>
    %113 = arith.subf %109, %112 : vector<1x2xf32>
    %cst_62 = arith.constant 1.000000e+00 : f32
    %114 = vector.broadcast %cst_62 : f32 to vector<1x2xf32>
    %115 = arith.subf %114, %113 : vector<1x2xf32>
    %116 = vector.broadcast %50 : f32 to vector<1x2xf32>
    %117 = arith.mulf %116, %115 : vector<1x2xf32>
    %118 = arith.addf %106, %117 : vector<1x2xf32>
    %119 = vector.broadcast %51 : f32 to vector<1x2xf32>
    %120 = arith.mulf %119, %113 : vector<1x2xf32>
    %121 = arith.addf %118, %120 : vector<1x2xf32>
    %122 = vector.broadcast %52 : f32 to vector<1x2xf32>
    %123 = math.exp %122 : vector<1x2xf32>
    %124 = vector.broadcast %53 : f32 to vector<1x2xf32>
    %125 = math.exp %124 : vector<1x2xf32>
    %126 = vector.broadcast %54 : f32 to vector<1x2xf32>
    %127 = math.exp %126 : vector<1x2xf32>
    %128 = vector.broadcast %55 : f32 to vector<1x2xf32>
    %129 = math.exp %128 : vector<1x2xf32>
    %130 = vector.extract_strided_slice %56 {offsets = [0, 0], sizes = [1, 2], strides = [1, 1]} : vector<8x2xf32> to vector<1x2xf32>
    %131 = vector.broadcast %48 : f32 to vector<1x2xf32>
    %132 = arith.addf %131, %130 : vector<1x2xf32>
    %133 = vector.extract_strided_slice %57 {offsets = [0, 0], sizes = [1, 2], strides = [1, 1]} : vector<8x2xf32> to vector<1x2xf32>
    %134 = vector.broadcast %49 : f32 to vector<1x2xf32>
    %135 = arith.addf %134, %133 : vector<1x2xf32>
    %c1_i32 = arith.constant 1 : i32
    %136 = arith.index_cast %c1_i32 : i32 to index
    %c0_63 = arith.constant 0 : index
    %137 = vector.load %arg10[%136, %c0_63] : memref<8x2xf32, #tpu.memory_space<vmem>>, vector<1x2xf32>
    %138 = arith.index_cast %c1_i32 : i32 to index
    %c0_64 = arith.constant 0 : index
    %139 = vector.load %arg11[%138, %c0_64] : memref<8x2xf32, #tpu.memory_space<vmem>>, vector<1x2xf32>
    %140 = arith.index_cast %c1_i32 : i32 to index
    %c0_65 = arith.constant 0 : index
    %141 = vector.load %arg4[%140, %c0_65] : memref<8x2xf32, #tpu.memory_space<vmem>>, vector<1x2xf32>
    %142 = arith.maximumf %132, %135 : vector<1x2xf32>
    %143 = arith.subf %132, %142 : vector<1x2xf32>
    %144 = math.exp %143 : vector<1x2xf32>
    %145 = arith.subf %135, %142 : vector<1x2xf32>
    %146 = math.exp %145 : vector<1x2xf32>
    %147 = arith.mulf %144, %123 : vector<1x2xf32>
    %148 = arith.mulf %146, %127 : vector<1x2xf32>
    %149 = arith.addf %147, %148 : vector<1x2xf32>
    %150 = math.log %149 : vector<1x2xf32>
    %151 = arith.addf %142, %150 : vector<1x2xf32>
    %152 = arith.addf %151, %137 : vector<1x2xf32>
    %153 = arith.mulf %144, %125 : vector<1x2xf32>
    %154 = arith.mulf %146, %129 : vector<1x2xf32>
    %155 = arith.addf %153, %154 : vector<1x2xf32>
    %156 = math.log %155 : vector<1x2xf32>
    %157 = arith.addf %142, %156 : vector<1x2xf32>
    %158 = arith.addf %157, %139 : vector<1x2xf32>
    %cst_66 = arith.constant 0.000000e+00 : f32
    %159 = vector.broadcast %cst_66 : f32 to vector<1x2xf32>
    %160 = arith.cmpf ogt, %141, %159 : vector<1x2xf32>
    %161 = arith.select %160, %152, %132 : vector<1x2xi1>, vector<1x2xf32>
    %162 = arith.select %160, %158, %135 : vector<1x2xi1>, vector<1x2xf32>
    %c2_i32 = arith.constant 2 : i32
    %163 = arith.index_cast %c2_i32 : i32 to index
    %c0_67 = arith.constant 0 : index
    %164 = vector.load %arg10[%163, %c0_67] : memref<8x2xf32, #tpu.memory_space<vmem>>, vector<1x2xf32>
    %165 = arith.index_cast %c2_i32 : i32 to index
    %c0_68 = arith.constant 0 : index
    %166 = vector.load %arg11[%165, %c0_68] : memref<8x2xf32, #tpu.memory_space<vmem>>, vector<1x2xf32>
    %167 = arith.index_cast %c2_i32 : i32 to index
    %c0_69 = arith.constant 0 : index
    %168 = vector.load %arg4[%167, %c0_69] : memref<8x2xf32, #tpu.memory_space<vmem>>, vector<1x2xf32>
    %169 = arith.maximumf %161, %162 : vector<1x2xf32>
    %170 = arith.subf %161, %169 : vector<1x2xf32>
    %171 = math.exp %170 : vector<1x2xf32>
    %172 = arith.subf %162, %169 : vector<1x2xf32>
    %173 = math.exp %172 : vector<1x2xf32>
    %174 = arith.mulf %171, %123 : vector<1x2xf32>
    %175 = arith.mulf %173, %127 : vector<1x2xf32>
    %176 = arith.addf %174, %175 : vector<1x2xf32>
    %177 = math.log %176 : vector<1x2xf32>
    %178 = arith.addf %169, %177 : vector<1x2xf32>
    %179 = arith.addf %178, %164 : vector<1x2xf32>
    %180 = arith.mulf %171, %125 : vector<1x2xf32>
    %181 = arith.mulf %173, %129 : vector<1x2xf32>
    %182 = arith.addf %180, %181 : vector<1x2xf32>
    %183 = math.log %182 : vector<1x2xf32>
    %184 = arith.addf %169, %183 : vector<1x2xf32>
    %185 = arith.addf %184, %166 : vector<1x2xf32>
    %cst_70 = arith.constant 0.000000e+00 : f32
    %186 = vector.broadcast %cst_70 : f32 to vector<1x2xf32>
    %187 = arith.cmpf ogt, %168, %186 : vector<1x2xf32>
    %188 = arith.select %187, %179, %161 : vector<1x2xi1>, vector<1x2xf32>
    %189 = arith.select %187, %185, %162 : vector<1x2xi1>, vector<1x2xf32>
    %c3_i32 = arith.constant 3 : i32
    %190 = arith.index_cast %c3_i32 : i32 to index
    %c0_71 = arith.constant 0 : index
    %191 = vector.load %arg10[%190, %c0_71] : memref<8x2xf32, #tpu.memory_space<vmem>>, vector<1x2xf32>
    %192 = arith.index_cast %c3_i32 : i32 to index
    %c0_72 = arith.constant 0 : index
    %193 = vector.load %arg11[%192, %c0_72] : memref<8x2xf32, #tpu.memory_space<vmem>>, vector<1x2xf32>
    %194 = arith.index_cast %c3_i32 : i32 to index
    %c0_73 = arith.constant 0 : index
    %195 = vector.load %arg4[%194, %c0_73] : memref<8x2xf32, #tpu.memory_space<vmem>>, vector<1x2xf32>
    %196 = arith.maximumf %188, %189 : vector<1x2xf32>
    %197 = arith.subf %188, %196 : vector<1x2xf32>
    %198 = math.exp %197 : vector<1x2xf32>
    %199 = arith.subf %189, %196 : vector<1x2xf32>
    %200 = math.exp %199 : vector<1x2xf32>
    %201 = arith.mulf %198, %123 : vector<1x2xf32>
    %202 = arith.mulf %200, %127 : vector<1x2xf32>
    %203 = arith.addf %201, %202 : vector<1x2xf32>
    %204 = math.log %203 : vector<1x2xf32>
    %205 = arith.addf %196, %204 : vector<1x2xf32>
    %206 = arith.addf %205, %191 : vector<1x2xf32>
    %207 = arith.mulf %198, %125 : vector<1x2xf32>
    %208 = arith.mulf %200, %129 : vector<1x2xf32>
    %209 = arith.addf %207, %208 : vector<1x2xf32>
    %210 = math.log %209 : vector<1x2xf32>
    %211 = arith.addf %196, %210 : vector<1x2xf32>
    %212 = arith.addf %211, %193 : vector<1x2xf32>
    %cst_74 = arith.constant 0.000000e+00 : f32
    %213 = vector.broadcast %cst_74 : f32 to vector<1x2xf32>
    %214 = arith.cmpf ogt, %195, %213 : vector<1x2xf32>
    %215 = arith.select %214, %206, %188 : vector<1x2xi1>, vector<1x2xf32>
    %216 = arith.select %214, %212, %189 : vector<1x2xi1>, vector<1x2xf32>
    %c4_i32 = arith.constant 4 : i32
    %217 = arith.index_cast %c4_i32 : i32 to index
    %c0_75 = arith.constant 0 : index
    %218 = vector.load %arg10[%217, %c0_75] : memref<8x2xf32, #tpu.memory_space<vmem>>, vector<1x2xf32>
    %219 = arith.index_cast %c4_i32 : i32 to index
    %c0_76 = arith.constant 0 : index
    %220 = vector.load %arg11[%219, %c0_76] : memref<8x2xf32, #tpu.memory_space<vmem>>, vector<1x2xf32>
    %221 = arith.index_cast %c4_i32 : i32 to index
    %c0_77 = arith.constant 0 : index
    %222 = vector.load %arg4[%221, %c0_77] : memref<8x2xf32, #tpu.memory_space<vmem>>, vector<1x2xf32>
    %223 = arith.maximumf %215, %216 : vector<1x2xf32>
    %224 = arith.subf %215, %223 : vector<1x2xf32>
    %225 = math.exp %224 : vector<1x2xf32>
    %226 = arith.subf %216, %223 : vector<1x2xf32>
    %227 = math.exp %226 : vector<1x2xf32>
    %228 = arith.mulf %225, %123 : vector<1x2xf32>
    %229 = arith.mulf %227, %127 : vector<1x2xf32>
    %230 = arith.addf %228, %229 : vector<1x2xf32>
    %231 = math.log %230 : vector<1x2xf32>
    %232 = arith.addf %223, %231 : vector<1x2xf32>
    %233 = arith.addf %232, %218 : vector<1x2xf32>
    %234 = arith.mulf %225, %125 : vector<1x2xf32>
    %235 = arith.mulf %227, %129 : vector<1x2xf32>
    %236 = arith.addf %234, %235 : vector<1x2xf32>
    %237 = math.log %236 : vector<1x2xf32>
    %238 = arith.addf %223, %237 : vector<1x2xf32>
    %239 = arith.addf %238, %220 : vector<1x2xf32>
    %cst_78 = arith.constant 0.000000e+00 : f32
    %240 = vector.broadcast %cst_78 : f32 to vector<1x2xf32>
    %241 = arith.cmpf ogt, %222, %240 : vector<1x2xf32>
    %242 = arith.select %241, %233, %215 : vector<1x2xi1>, vector<1x2xf32>
    %243 = arith.select %241, %239, %216 : vector<1x2xi1>, vector<1x2xf32>
    %c5_i32 = arith.constant 5 : i32
    %244 = arith.index_cast %c5_i32 : i32 to index
    %c0_79 = arith.constant 0 : index
    %245 = vector.load %arg10[%244, %c0_79] : memref<8x2xf32, #tpu.memory_space<vmem>>, vector<1x2xf32>
    %246 = arith.index_cast %c5_i32 : i32 to index
    %c0_80 = arith.constant 0 : index
    %247 = vector.load %arg11[%246, %c0_80] : memref<8x2xf32, #tpu.memory_space<vmem>>, vector<1x2xf32>
    %248 = arith.index_cast %c5_i32 : i32 to index
    %c0_81 = arith.constant 0 : index
    %249 = vector.load %arg4[%248, %c0_81] : memref<8x2xf32, #tpu.memory_space<vmem>>, vector<1x2xf32>
    %250 = arith.maximumf %242, %243 : vector<1x2xf32>
    %251 = arith.subf %242, %250 : vector<1x2xf32>
    %252 = math.exp %251 : vector<1x2xf32>
    %253 = arith.subf %243, %250 : vector<1x2xf32>
    %254 = math.exp %253 : vector<1x2xf32>
    %255 = arith.mulf %252, %123 : vector<1x2xf32>
    %256 = arith.mulf %254, %127 : vector<1x2xf32>
    %257 = arith.addf %255, %256 : vector<1x2xf32>
    %258 = math.log %257 : vector<1x2xf32>
    %259 = arith.addf %250, %258 : vector<1x2xf32>
    %260 = arith.addf %259, %245 : vector<1x2xf32>
    %261 = arith.mulf %252, %125 : vector<1x2xf32>
    %262 = arith.mulf %254, %129 : vector<1x2xf32>
    %263 = arith.addf %261, %262 : vector<1x2xf32>
    %264 = math.log %263 : vector<1x2xf32>
    %265 = arith.addf %250, %264 : vector<1x2xf32>
    %266 = arith.addf %265, %247 : vector<1x2xf32>
    %cst_82 = arith.constant 0.000000e+00 : f32
    %267 = vector.broadcast %cst_82 : f32 to vector<1x2xf32>
    %268 = arith.cmpf ogt, %249, %267 : vector<1x2xf32>
    %269 = arith.select %268, %260, %242 : vector<1x2xi1>, vector<1x2xf32>
    %270 = arith.select %268, %266, %243 : vector<1x2xi1>, vector<1x2xf32>
    %c6_i32 = arith.constant 6 : i32
    %271 = arith.index_cast %c6_i32 : i32 to index
    %c0_83 = arith.constant 0 : index
    %272 = vector.load %arg10[%271, %c0_83] : memref<8x2xf32, #tpu.memory_space<vmem>>, vector<1x2xf32>
    %273 = arith.index_cast %c6_i32 : i32 to index
    %c0_84 = arith.constant 0 : index
    %274 = vector.load %arg11[%273, %c0_84] : memref<8x2xf32, #tpu.memory_space<vmem>>, vector<1x2xf32>
    %275 = arith.index_cast %c6_i32 : i32 to index
    %c0_85 = arith.constant 0 : index
    %276 = vector.load %arg4[%275, %c0_85] : memref<8x2xf32, #tpu.memory_space<vmem>>, vector<1x2xf32>
    %277 = arith.maximumf %269, %270 : vector<1x2xf32>
    %278 = arith.subf %269, %277 : vector<1x2xf32>
    %279 = math.exp %278 : vector<1x2xf32>
    %280 = arith.subf %270, %277 : vector<1x2xf32>
    %281 = math.exp %280 : vector<1x2xf32>
    %282 = arith.mulf %279, %123 : vector<1x2xf32>
    %283 = arith.mulf %281, %127 : vector<1x2xf32>
    %284 = arith.addf %282, %283 : vector<1x2xf32>
    %285 = math.log %284 : vector<1x2xf32>
    %286 = arith.addf %277, %285 : vector<1x2xf32>
    %287 = arith.addf %286, %272 : vector<1x2xf32>
    %288 = arith.mulf %279, %125 : vector<1x2xf32>
    %289 = arith.mulf %281, %129 : vector<1x2xf32>
    %290 = arith.addf %288, %289 : vector<1x2xf32>
    %291 = math.log %290 : vector<1x2xf32>
    %292 = arith.addf %277, %291 : vector<1x2xf32>
    %293 = arith.addf %292, %274 : vector<1x2xf32>
    %cst_86 = arith.constant 0.000000e+00 : f32
    %294 = vector.broadcast %cst_86 : f32 to vector<1x2xf32>
    %295 = arith.cmpf ogt, %276, %294 : vector<1x2xf32>
    %296 = arith.select %295, %287, %269 : vector<1x2xi1>, vector<1x2xf32>
    %297 = arith.select %295, %293, %270 : vector<1x2xi1>, vector<1x2xf32>
    %c7_i32 = arith.constant 7 : i32
    %298 = arith.index_cast %c7_i32 : i32 to index
    %c0_87 = arith.constant 0 : index
    %299 = vector.load %arg10[%298, %c0_87] : memref<8x2xf32, #tpu.memory_space<vmem>>, vector<1x2xf32>
    %300 = arith.index_cast %c7_i32 : i32 to index
    %c0_88 = arith.constant 0 : index
    %301 = vector.load %arg11[%300, %c0_88] : memref<8x2xf32, #tpu.memory_space<vmem>>, vector<1x2xf32>
    %302 = arith.index_cast %c7_i32 : i32 to index
    %c0_89 = arith.constant 0 : index
    %303 = vector.load %arg4[%302, %c0_89] : memref<8x2xf32, #tpu.memory_space<vmem>>, vector<1x2xf32>
    %304 = arith.maximumf %296, %297 : vector<1x2xf32>
    %305 = arith.subf %296, %304 : vector<1x2xf32>
    %306 = math.exp %305 : vector<1x2xf32>
    %307 = arith.subf %297, %304 : vector<1x2xf32>
    %308 = math.exp %307 : vector<1x2xf32>
    %309 = arith.mulf %306, %123 : vector<1x2xf32>
    %310 = arith.mulf %308, %127 : vector<1x2xf32>
    %311 = arith.addf %309, %310 : vector<1x2xf32>
    %312 = math.log %311 : vector<1x2xf32>
    %313 = arith.addf %304, %312 : vector<1x2xf32>
    %314 = arith.addf %313, %299 : vector<1x2xf32>
    %315 = arith.mulf %306, %125 : vector<1x2xf32>
    %316 = arith.mulf %308, %129 : vector<1x2xf32>
    %317 = arith.addf %315, %316 : vector<1x2xf32>
    %318 = math.log %317 : vector<1x2xf32>
    %319 = arith.addf %304, %318 : vector<1x2xf32>
    %320 = arith.addf %319, %301 : vector<1x2xf32>
    %cst_90 = arith.constant 0.000000e+00 : f32
    %321 = vector.broadcast %cst_90 : f32 to vector<1x2xf32>
    %322 = arith.cmpf ogt, %303, %321 : vector<1x2xf32>
    %323 = arith.select %322, %314, %296 : vector<1x2xi1>, vector<1x2xf32>
    %324 = arith.select %322, %320, %297 : vector<1x2xi1>, vector<1x2xf32>
    %c7_i32_91 = arith.constant 7 : i32
    %325 = vector.broadcast %50 : f32 to vector<1x2xf32>
    %326 = arith.addf %323, %325 : vector<1x2xf32>
    %327 = vector.broadcast %51 : f32 to vector<1x2xf32>
    %328 = arith.addf %324, %327 : vector<1x2xf32>
    %329 = arith.maximumf %326, %328 : vector<1x2xf32>
    %330 = arith.subf %326, %328 : vector<1x2xf32>
    %331 = arith.cmpf one, %330, %330 : vector<1x2xf32>
    %332 = arith.addf %326, %328 : vector<1x2xf32>
    %333 = math.absf %330 : vector<1x2xf32>
    %cst_92 = arith.constant 0.000000e+00 : f32
    %334 = vector.broadcast %cst_92 : f32 to vector<1x2xf32>
    %335 = arith.subf %334, %333 : vector<1x2xf32>
    %336 = math.exp %335 : vector<1x2xf32>
    %337 = math.log1p %336 : vector<1x2xf32>
    %338 = arith.addf %329, %337 : vector<1x2xf32>
    %339 = arith.select %331, %332, %338 : vector<1x2xi1>, vector<1x2xf32>
    %340 = arith.subf %121, %339 : vector<1x2xf32>
    %cst_93 = arith.constant dense<0.000000e+00> : vector<1xf32>
    %341 = vector.multi_reduction <add>, %340, %cst_93 [1] : vector<1x2xf32> to vector<1xf32>
    %342 = vector.shape_cast %341 : vector<1xf32> to vector<1x1xf32>
    %cst_94 = arith.constant 0.000000e+00 : f32
    %343 = vector.broadcast %cst_94 : f32 to vector<1x1xf32>
    %344 = arith.subf %343, %342 : vector<1x1xf32>
    %c0_95 = arith.constant 0 : index
    %c0_96 = arith.constant 0 : index
    %345 = vector.load %arg9[%c0_95, %c0_96] : memref<1x1xf32, #tpu.memory_space<vmem>>, vector<1x1xf32>
    tpu.vector_store %arg9[%c0_95, %c0_96], %344 {strides = array<i32>} : memref<1x1xf32, #tpu.memory_space<vmem>>, vector<1x1xf32>,
    return
  }
}

</mosaic_0001>

<llo_original>
// kernel: topic_segment_forward.1
$region0: #{topic_segment_forward.1}
  #allocation0 [shape = 'u32[]', space=smem, size = 0x4, offset = 0x4, fixed_abs, tag = 'smem constant byte address 0x4 - core index']
  #allocation1 [shape = 'u32[144,128]{1,0:T(1,128)}', space=vmem, size = 0x12000, scoped, tag = 'internal scratch']
  #allocation2 [shape = 'f32[8,2]{1,0:T(8,128)}', space=vmem, size = 0x1000, scoped, tag = 'scratch operand']
  #allocation3 [shape = 'f32[8,2]{1,0:T(8,128)}', space=vmem, size = 0x1000, scoped, tag = 'scratch operand']
  %s0 = inlined_call_operand.vmem [shape: f32[2,8,32], index: 0, kind: input, shape index: {}]
  %s1 = inlined_call_operand.vmem [shape: f32[2,32], index: 1, kind: input, shape index: {}]
  %s2 = inlined_call_operand.vmem [shape: f32[2], index: 2, kind: input, shape index: {}]
  %s3 = inlined_call_operand.vmem [shape: f32[8,2], index: 3, kind: input, shape index: {}]
  %s4 = inlined_call_operand.vmem [shape: f32[8,2], index: 4, kind: input, shape index: {}]
  %s5 = inlined_call_operand.vmem [shape: f32[2], index: 5, kind: input, shape index: {}]
  %s6 = inlined_call_operand.vmem [shape: f32[2], index: 6, kind: input, shape index: {}]
  %s7 = inlined_call_operand.vmem [shape: f32[2,2], index: 7, kind: input, shape index: {}]
  %s8 = inlined_call_operand.vmem [shape: f32[2,8,2], index: 8, kind: output, shape index: {0}]
  %s9 = inlined_call_operand.hbm [shape: f32[1,1], index: 9, kind: output, shape index: {1}]
  %10 = xla_tuple %s8, %s9
  %s11 = sld [smem:[#allocation0]]
  $region66: #{topic_segment_forward.1} parent=0
    _
  %s13 = ssub.s32 1, %s11
  %s14 = scalar_select 0, %s13, %s11
  $region1: #{topic_segment_forward.1} parent=0
    #allocation4 [shape = 'u8[512]{0}', space=smem, size = 0x200, scoped, tag = 'input window, operand 2, single buffered']
    #allocation5 [shape = 's32[1]{0}', space=sflag, size = 0x4, scoped, tag = 'scoped memory for topic_segment_forward.1']
    #allocation6 [shape = 's32[1]{0}', space=sflag, size = 0x4, scoped, tag = 'scoped memory for topic_segment_forward.1']
    #allocation7 [shape = 'u8[512]{0}', space=smem, size = 0x200, scoped, tag = 'input window, operand 5, single buffered']
    #allocation8 [shape = 's32[1]{0}', space=sflag, size = 0x4, scoped, tag = 'scoped memory for topic_segment_forward.1']
    #allocation9 [shape = 'u8[512]{0}', space=smem, size = 0x200, scoped, tag = 'input window, operand 6, single buffered']
    #allocation10 [shape = 'u8[1024]{0}', space=smem, size = 0x400, scoped, tag = 'input window, operand 7, single buffered']
    #allocation11 [shape = 's32[1]{0}', space=sflag, size = 0x4, scoped, tag = 'scoped memory for topic_segment_forward.1']
    #allocation12 [shape = 'u8[512]{0}', space=vmem, size = 0x400, scoped, tag = 'output window, operand 1, single buffered']
    %15 = vsyncpa [#allocation6], 0
    %16 = vsyncpa [#allocation8], 0
    %17 = vsyncpa [#allocation11], 0
    %18 = vsyncpa [#allocation5], 0
    // Predicated region
    $region2: #{topic_segment_forward.1} parent=1 // pred_check
      _
    $region3: #{topic_segment_forward.1} parent=1 // pred_check_branch
      %20 = sbr.rel (0) target = $region5
    $region4: #{topic_segment_forward.1} parent=1 // pred_region
      _
    $region5: #{topic_segment_forward.1} parent=1 // pred_fallthru
      _
    // Predicated region
    $region6: #{topic_segment_forward.1} parent=1 // pred_check
      _
    $region7: #{topic_segment_forward.1} parent=1 // pred_check_branch
      %22 = sbr.rel (0) target = $region9
    $region8: #{topic_segment_forward.1} parent=1 // pred_region
      _
    $region9: #{topic_segment_forward.1} parent=1 // pred_fallthru
      _
    // Predicated region
    $region10: #{topic_segment_forward.1} parent=1 // pred_check
      _
    $region11: #{topic_segment_forward.1} parent=1 // pred_check_branch
      %24 = sbr.rel (0) target = $region13
    $region12: #{topic_segment_forward.1} parent=1 // pred_region
      %s26 = ssub.s32 16, 16
      %27 = vsyncadd [#allocation6], %s26
      %s29 = sshll.u32 %s2, 4
      %s30 = int_to_ptr.vmem [resolvable:$true] %s29
      %32 = dma.vmem_to_smem %s30, 16, [#allocation4], [#allocation6]
    $region13: #{topic_segment_forward.1} parent=1 // pred_fallthru
      _
    // Predicated region
    $region14: #{topic_segment_forward.1} parent=1 // pred_check
      _
    $region15: #{topic_segment_forward.1} parent=1 // pred_check_branch
      %34 = sbr.rel (0) target = $region17
    $region16: #{topic_segment_forward.1} parent=1 // pred_region
      _
    $region17: #{topic_segment_forward.1} parent=1 // pred_fallthru
      _
    // Predicated region
    $region18: #{topic_segment_forward.1} parent=1 // pred_check
      _
    $region19: #{topic_segment_forward.1} parent=1 // pred_check_branch
      %36 = sbr.rel (0) target = $region21
    $region20: #{topic_segment_forward.1} parent=1 // pred_region
      _
    $region21: #{topic_segment_forward.1} parent=1 // pred_fallthru
      _
    // Predicated region
    $region22: #{topic_segment_forward.1} parent=1 // pred_check
      _
    $region23: #{topic_segment_forward.1} parent=1 // pred_check_branch
      %38 = sbr.rel (0) target = $region25
    $region24: #{topic_segment_forward.1} parent=1 // pred_region
      %s40 = ssub.s32 16, 16
      %41 = vsyncadd [#allocation8], %s40
      %s43 = sshll.u32 %s5, 4
      %s44 = int_to_ptr.vmem [resolvable:$true] %s43
      %46 = dma.vmem_to_smem %s44, 16, [#allocation7], [#allocation8]
    $region25: #{topic_segment_forward.1} parent=1 // pred_fallthru
      _
    // Predicated region
    $region26: #{topic_segment_forward.1} parent=1 // pred_check
      _
    $region27: #{topic_segment_forward.1} parent=1 // pred_check_branch
      %48 = sbr.rel (0) target = $region29
    $region28: #{topic_segment_forward.1} parent=1 // pred_region
      %s50 = ssub.s32 16, 16
      %51 = vsyncadd [#allocation8], %s50
      %s53 = sshll.u32 %s6, 4
      %s54 = int_to_ptr.vmem [resolvable:$true] %s53
      %56 = dma.vmem_to_smem %s54, 16, [#allocation9], [#allocation8]
    $region29: #{topic_segment_forward.1} parent=1 // pred_fallthru
      _
    // Predicated region
    $region30: #{topic_segment_forward.1} parent=1 // pred_check
      _
    $region31: #{topic_segment_forward.1} parent=1 // pred_check_branch
      %58 = sbr.rel (0) target = $region33
    $region32: #{topic_segment_forward.1} parent=1 // pred_region
      %s60 = ssub.s32 32, 32
      %61 = vsyncadd [#allocation11], %s60
      %s63 = sshll.u32 %s7, 4
      %s64 = int_to_ptr.vmem [resolvable:$true] %s63
      %66 = dma.vmem_to_smem %s64, 32, [#allocation10], [#allocation11]
    $region33: #{topic_segment_forward.1} parent=1 // pred_fallthru
      _
    // Predicated region
    $region34: #{topic_segment_forward.1} parent=1 // pred_check
      _
    $region35: #{topic_segment_forward.1} parent=1 // pred_check_branch
      %68 = sbr.rel (0) target = $region37
    $region36: #{topic_segment_forward.1} parent=1 // pred_region
      %69 = dma.done [#allocation6], 16
    $region37: #{topic_segment_forward.1} parent=1 // pred_fallthru
      _
    // Predicated region
    $region38: #{topic_segment_forward.1} parent=1 // pred_check
      _
    $region39: #{topic_segment_forward.1} parent=1 // pred_check_branch
      %71 = sbr.rel (0) target = $region41
    $region40: #{topic_segment_forward.1} parent=1 // pred_region
      %72 = dma.done [#allocation8], 16
    $region41: #{topic_segment_forward.1} parent=1 // pred_fallthru
      _
    // Predicated region
    $region42: #{topic_segment_forward.1} parent=1 // pred_check
      _
    $region43: #{topic_segment_forward.1} parent=1 // pred_check_branch
      %74 = sbr.rel (0) target = $region45
    $region44: #{topic_segment_forward.1} parent=1 // pred_region
      %75 = dma.done [#allocation8], 16
    $region45: #{topic_segment_forward.1} parent=1 // pred_fallthru
      _
    // Predicated region
    $region46: #{topic_segment_forward.1} parent=1 // pred_check
      _
    $region47: #{topic_segment_forward.1} parent=1 // pred_check_branch
      %77 = sbr.rel (0) target = $region49
    $region48: #{topic_segment_forward.1} parent=1 // pred_region
      %78 = dma.done [#allocation11], 32
    $region49: #{topic_segment_forward.1} parent=1 // pred_fallthru
      _
    %79 = sfence
    %v80 = vld [vmem:[%s1] sm:$0x1]
    %v81 = vld [vmem:[%s1 + $0x1] sm:$0x1]
    %s82 = sld [smem:[#allocation4]]
    %s83 = sld [smem:[#allocation4 + $0x1]]
    %v84 = vld [vmem:[%s0] sm:$0xff]
    %v85 = vlaneseq
    %v86 = vshrl.u32 %v85, 7
    %v87 = vsub.s32 0, %v86
    %v88 = vrot.slane %v80, %v87
    %v89 = vmul.f32 %v84, %v88
    %vm90 = vcmask 261120
    %v91 = vsel %vm90, %v89, 0.0
    %92 = vadd.xlane.f32.xlu0 %v91
    %v93 = vpop.xlane.xlu0 %92
    %v94 = vstv %s82
    %v95 = vadd.f32 %v93, %v94
    %v96 = vlaneseq
    %v97 = vshrl.u32 %v96, 7
    %v98 = vsub.s32 0, %v97
    %v99 = vrot.slane %v81, %v98
    %v100 = vmul.f32 %v84, %v99
    %v101 = vsel %vm90, %v100, 0.0
    %102 = vadd.xlane.f32.xlu0 %v101
    %v103 = vpop.xlane.xlu0 %102
    %v104 = vstv %s83
    %v105 = vadd.f32 %v103, %v104
    %vm106 = vcmask 7168
    %107 = vst.msk [vmem:[#allocation2] sm:$0xff] %vm106, %v95
    %108 = vst.msk [vmem:[#allocation3] sm:$0xff] %vm106, %v105
    %109 = vst.msk [vmem:[%s8] sm:$0xff] %vm106, %v95
    %vm110 = vcmask 15368
    %111 = vst.msk [vmem:[%s8] sm:$0xff] %vm110, %v105
    %s112 = scalar_lea.vmem %s0, 8
    %v113 = vld [vmem:[%s112] sm:$0xff]
    %v114 = vmul.f32 %v113, %v88
    %v115 = vsel %vm90, %v114, 0.0
    %116 = vadd.xlane.f32.xlu0 %v115
    %v117 = vpop.xlane.xlu0 %116
    %v118 = vadd.f32 %v117, %v94
    %v119 = vmul.f32 %v113, %v99
    %v120 = vsel %vm90, %v119, 0.0
    %121 = vadd.xlane.f32.xlu0 %v120
    %v122 = vpop.xlane.xlu0 %121
    %v123 = vadd.f32 %v122, %v104
    %124 = vst.msk [vmem:[#allocation2] sm:$0xff] %vm110, %v118
    %125 = vst.msk [vmem:[#allocation3] sm:$0xff] %vm110, %v123
    %s126 = scalar_lea.vmem %s8, 8
    %127 = vst.msk [vmem:[%s126] sm:$0xff] %vm106, %v118
    %128 = vst.msk [vmem:[%s126] sm:$0xff] %vm110, %v123
    %s129 = sld [smem:[#allocation7]]
    %s130 = sld [smem:[#allocation7 + $0x1]]
    %s131 = sld [smem:[#allocation9]]
    %s132 = sld [smem:[#allocation9 + $0x1]]
    %s133 = sld [smem:[#allocation10]]
    %s134 = sld [smem:[#allocation10 + $0x1]]
    %s135 = sld [smem:[#allocation10 + $0x80]]
    %s136 = sld [smem:[#allocation10 + $0x81]]
    %v137 = vld [vmem:[#allocation2] sm:$0xff]
    %v138 = vld [vmem:[#allocation3] sm:$0xff]
    %v139 = vld [vmem:[%s3] sm:$0xff]
    %v140 = vld [vmem:[%s4] sm:$0xff]
    %v141 = vsub.f32 1.0, %v139
    %v142 = vmul.f32 %v137, %v141
    %v143 = vmul.f32 %v138, %v139
    %v144 = vadd.f32 %v142, %v143
    %v145 = vstv %s129
    %v146 = vmul.f32 %v145, %v141
    %v147 = vstv %s130
    %v148 = vmul.f32 %v147, %v139
    %v149 = vadd.f32 %v146, %v148
    %v150 = vadd.f32 %v149, %v144
    %v151 = vstv %s133
    %v152 = vmul.f32 %v151, %v141
    %v154 = vrot.slane %v141, 1
    %v156 = vmul.f32 %v152, %v154
    %v157 = vstv %s134
    %v158 = vmul.f32 %v157, %v141
    %v160 = vrot.slane %v139, 1
    %v162 = vmul.f32 %v158, %v160
    %v163 = vadd.f32 %v156, %v162
    %v164 = vstv %s135
    %v165 = vmul.f32 %v164, %v139
    %v166 = vmul.f32 %v165, %v154
    %v167 = vadd.f32 %v163, %v166
    %v168 = vstv %s136
    %v169 = vmul.f32 %v168, %v139
    %v170 = vmul.f32 %v169, %v160
    %v171 = vadd.f32 %v167, %v170
    %v173 = vrot.slane %v144, 1
    %v175 = vadd.f32 %v171, %v173
    %v177 = vrot.slane %v175, 7
    %v179 = vmul.f32 %v140, %v177
    %v181 = vrot.slane %v179, 1
    %vm183 = vcmask 14336
    %v184 = vsel %vm183, %v181, 0.0
    %v185 = vrot.slane %v184, 4
    %v186 = vadd.f32 %v184, %v185
    %v187 = vrot.slane %v186, 2
    %v188 = vadd.f32 %v186, %v187
    %v189 = vrot.slane %v188, 1
    %v190 = vadd.f32 %v188, %v189
    %v191 = vadd.f32 %v150, %v190
    %v192 = vmul.f32 %v139, %v140
    %vm193 = vcmask 15360
    %v194 = vsel %vm193, %v192, 0.0
    %v195 = vrot.slane %v194, 4
    %v196 = vadd.f32 %v194, %v195
    %v197 = vrot.slane %v196, 2
    %v198 = vadd.f32 %v196, %v197
    %v199 = vrot.slane %v198, 1
    %v200 = vadd.f32 %v198, %v199
    %v202 = vrot.slane %v140, 1
    %v204 = vmul.f32 %v139, %v202
    %v205 = vsel %vm183, %v204, 0.0
    %v206 = vrot.slane %v205, 4
    %v207 = vadd.f32 %v205, %v206
    %v208 = vrot.slane %v207, 2
    %v209 = vadd.f32 %v207, %v208
    %v210 = vrot.slane %v209, 1
    %v211 = vadd.f32 %v209, %v210
    %v212 = vsub.f32 %v200, %v211
    %v213 = vsub.f32 1.0, %v212
    %v214 = vstv %s131
    %v215 = vmul.f32 %v214, %v213
    %v216 = vadd.f32 %v191, %v215
    %v217 = vstv %s132
    %v218 = vmul.f32 %v217, %v212
    %v219 = vadd.f32 %v216, %v218
    %v220 = vmul.f32 %v151, 1.442695
    %v221 = vpow.pop %v220
    %v222 = vmul.f32 %v157, 1.442695
    %v223 = vpow.pop %v222
    %v224 = vmul.f32 %v164, 1.442695
    %v225 = vpow.pop %v224
    %v226 = vmul.f32 %v168, 1.442695
    %v227 = vpow.pop %v226
    %v228 = vadd.f32 %v145, %v137
    %v229 = vadd.f32 %v147, %v138
    %v230 = vld [vmem:[#allocation2 + $0x1] sm:$0x1]
    %v231 = vld [vmem:[#allocation3 + $0x1] sm:$0x1]
    %v232 = vld [vmem:[%s4 + $0x1] sm:$0x1]
    %v233 = vmax.f32 %v228, %v229
    %v234 = vsub.f32 %v228, %v233
    %v235 = vmul.f32 %v234, 1.442695
    %v236 = vpow.pop %v235
    %v237 = vsub.f32 %v229, %v233
    %v238 = vmul.f32 %v237, 1.442695
    %v239 = vpow.pop %v238
    %v240 = vmul.f32 %v236, %v221
    %v241 = vmul.f32 %v239, %v225
    %v242 = vadd.f32 %v240, %v241
    %v243 = vlog2.pop %v242
    %v244 = vmul.f32 %v243, 0.6931472
    %v245 = vadd.f32 %v233, %v244
    %v246 = vadd.f32 %v245, %v230
    %v247 = vmul.f32 %v236, %v223
    %v248 = vmul.f32 %v239, %v227
    %v249 = vadd.f32 %v247, %v248
    %v250 = vlog2.pop %v249
    %v251 = vmul.f32 %v250, 0.6931472
    %v252 = vadd.f32 %v233, %v251
    %v253 = vadd.f32 %v252, %v231
    %vm254 = vcmp.gt.f32.partialorder %v232, 0.0
    %v255 = vsel %vm254, %v246, %v228
    %v256 = vsel %vm254, %v253, %v229
    %v257 = vld [vmem:[#allocation2 + $0x2] sm:$0x1]
    %v258 = vld [vmem:[#allocation3 + $0x2] sm:$0x1]
    %v259 = vld [vmem:[%s4 + $0x2] sm:$0x1]
    %v260 = vmax.f32 %v255, %v256
    %v261 = vsub.f32 %v255, %v260
    %v262 = vmul.f32 %v261, 1.442695
    %v263 = vpow.pop %v262
    %v264 = vsub.f32 %v256, %v260
    %v265 = vmul.f32 %v264, 1.442695
    %v266 = vpow.pop %v265
    %v267 = vmul.f32 %v263, %v221
    %v268 = vmul.f32 %v266, %v225
    %v269 = vadd.f32 %v267, %v268
    %v270 = vlog2.pop %v269
    %v271 = vmul.f32 %v270, 0.6931472
    %v272 = vadd.f32 %v260, %v271
    %v273 = vadd.f32 %v272, %v257
    %v274 = vmul.f32 %v263, %v223
    %v275 = vmul.f32 %v266, %v227
    %v276 = vadd.f32 %v274, %v275
    %v277 = vlog2.pop %v276
    %v278 = vmul.f32 %v277, 0.6931472
    %v279 = vadd.f32 %v260, %v278
    %v280 = vadd.f32 %v279, %v258
    %vm281 = vcmp.gt.f32.partialorder %v259, 0.0
    %v282 = vsel %vm281, %v273, %v255
    %v283 = vsel %vm281, %v280, %v256
    %v284 = vld [vmem:[#allocation2 + $0x3] sm:$0x1]
    %v285 = vld [vmem:[#allocation3 + $0x3] sm:$0x1]
    %v286 = vld [vmem:[%s4 + $0x3] sm:$0x1]
    %v287 = vmax.f32 %v282, %v283
    %v288 = vsub.f32 %v282, %v287
    %v289 = vmul.f32 %v288, 1.442695
    %v290 = vpow.pop %v289
    %v291 = vsub.f32 %v283, %v287
    %v292 = vmul.f32 %v291, 1.442695
    %v293 = vpow.pop %v292
    %v294 = vmul.f32 %v290, %v221
    %v295 = vmul.f32 %v293, %v225
    %v296 = vadd.f32 %v294, %v295
    %v297 = vlog2.pop %v296
    %v298 = vmul.f32 %v297, 0.6931472
    %v299 = vadd.f32 %v287, %v298
    %v300 = vadd.f32 %v299, %v284
    %v301 = vmul.f32 %v290, %v223
    %v302 = vmul.f32 %v293, %v227
    %v303 = vadd.f32 %v301, %v302
    %v304 = vlog2.pop %v303
    %v305 = vmul.f32 %v304, 0.6931472
    %v306 = vadd.f32 %v287, %v305
    %v307 = vadd.f32 %v306, %v285
    %vm308 = vcmp.gt.f32.partialorder %v286, 0.0
    %v309 = vsel %vm308, %v300, %v282
    %v310 = vsel %vm308, %v307, %v283
    %v311 = vld [vmem:[#allocation2 + $0x4] sm:$0x1]
    %v312 = vld [vmem:[#allocation3 + $0x4] sm:$0x1]
    %v313 = vld [vmem:[%s4 + $0x4] sm:$0x1]
    %v314 = vmax.f32 %v309, %v310
    %v315 = vsub.f32 %v309, %v314
    %v316 = vmul.f32 %v315, 1.442695
    %v317 = vpow.pop %v316
    %v318 = vsub.f32 %v310, %v314
    %v319 = vmul.f32 %v318, 1.442695
    %v320 = vpow.pop %v319
    %v321 = vmul.f32 %v317, %v221
    %v322 = vmul.f32 %v320, %v225
    %v323 = vadd.f32 %v321, %v322
    %v324 = vlog2.pop %v323
    %v325 = vmul.f32 %v324, 0.6931472
    %v326 = vadd.f32 %v314, %v325
    %v327 = vadd.f32 %v326, %v311
    %v328 = vmul.f32 %v317, %v223
    %v329 = vmul.f32 %v320, %v227
    %v330 = vadd.f32 %v328, %v329
    %v331 = vlog2.pop %v330
    %v332 = vmul.f32 %v331, 0.6931472
    %v333 = vadd.f32 %v314, %v332
    %v334 = vadd.f32 %v333, %v312
    %vm335 = vcmp.gt.f32.partialorder %v313, 0.0
    %v336 = vsel %vm335, %v327, %v309
    %v337 = vsel %vm335, %v334, %v310
    %v338 = vld [vmem:[#allocation2 + $0x5] sm:$0x1]
    %v339 = vld [vmem:[#allocation3 + $0x5] sm:$0x1]
    %v340 = vld [vmem:[%s4 + $0x5] sm:$0x1]
    %v341 = vmax.f32 %v336, %v337
    %v342 = vsub.f32 %v336, %v341
    %v343 = vmul.f32 %v342, 1.442695
    %v344 = vpow.pop %v343
    %v345 = vsub.f32 %v337, %v341
    %v346 = vmul.f32 %v345, 1.442695
    %v347 = vpow.pop %v346
    %v348 = vmul.f32 %v344, %v221
    %v349 = vmul.f32 %v347, %v225
    %v350 = vadd.f32 %v348, %v349
    %v351 = vlog2.pop %v350
    %v352 = vmul.f32 %v351, 0.6931472
    %v353 = vadd.f32 %v341, %v352
    %v354 = vadd.f32 %v353, %v338
    %v355 = vmul.f32 %v344, %v223
    %v356 = vmul.f32 %v347, %v227
    %v357 = vadd.f32 %v355, %v356
    %v358 = vlog2.pop %v357
    %v359 = vmul.f32 %v358, 0.6931472
    %v360 = vadd.f32 %v341, %v359
    %v361 = vadd.f32 %v360, %v339
    %vm362 = vcmp.gt.f32.partialorder %v340, 0.0
    %v363 = vsel %vm362, %v354, %v336
    %v364 = vsel %vm362, %v361, %v337
    %v365 = vld [vmem:[#allocation2 + $0x6] sm:$0x1]
    %v366 = vld [vmem:[#allocation3 + $0x6] sm:$0x1]
    %v367 = vld [vmem:[%s4 + $0x6] sm:$0x1]
    %v368 = vmax.f32 %v363, %v364
    %v369 = vsub.f32 %v363, %v368
    %v370 = vmul.f32 %v369, 1.442695
    %v371 = vpow.pop %v370
    %v372 = vsub.f32 %v364, %v368
    %v373 = vmul.f32 %v372, 1.442695
    %v374 = vpow.pop %v373
    %v375 = vmul.f32 %v371, %v221
    %v376 = vmul.f32 %v374, %v225
    %v377 = vadd.f32 %v375, %v376
    %v378 = vlog2.pop %v377
    %v379 = vmul.f32 %v378, 0.6931472
    %v380 = vadd.f32 %v368, %v379
    %v381 = vadd.f32 %v380, %v365
    %v382 = vmul.f32 %v371, %v223
    %v383 = vmul.f32 %v374, %v227
    %v384 = vadd.f32 %v382, %v383
    %v385 = vlog2.pop %v384
    %v386 = vmul.f32 %v385, 0.6931472
    %v387 = vadd.f32 %v368, %v386
    %v388 = vadd.f32 %v387, %v366
    %vm389 = vcmp.gt.f32.partialorder %v367, 0.0
    %v390 = vsel %vm389, %v381, %v363
    %v391 = vsel %vm389, %v388, %v364
    %v392 = vld [vmem:[#allocation2 + $0x7] sm:$0x1]
    %v393 = vld [vmem:[#allocation3 + $0x7] sm:$0x1]
    %v394 = vld [vmem:[%s4 + $0x7] sm:$0x1]
    %v395 = vmax.f32 %v390, %v391
    %v396 = vsub.f32 %v390, %v395
    %v397 = vmul.f32 %v396, 1.442695
    %v398 = vpow.pop %v397
    %v399 = vsub.f32 %v391, %v395
    %v400 = vmul.f32 %v399, 1.442695
    %v401 = vpow.pop %v400
    %v402 = vmul.f32 %v398, %v221
    %v403 = vmul.f32 %v401, %v225
    %v404 = vadd.f32 %v402, %v403
    %v405 = vlog2.pop %v404
    %v406 = vmul.f32 %v405, 0.6931472
    %v407 = vadd.f32 %v395, %v406
    %v408 = vadd.f32 %v407, %v392
    %v409 = vmul.f32 %v398, %v223
    %v410 = vmul.f32 %v401, %v227
    %v411 = vadd.f32 %v409, %v410
    %v412 = vlog2.pop %v411
    %v413 = vmul.f32 %v412, 0.6931472
    %v414 = vadd.f32 %v395, %v413
    %v415 = vadd.f32 %v414, %v393
    %vm416 = vcmp.gt.f32.partialorder %v394, 0.0
    %v417 = vsel %vm416, %v408, %v390
    %v418 = vsel %vm416, %v415, %v391
    %v419 = vadd.f32 %v417, %v214
    %v420 = vadd.f32 %v418, %v217
    %v421 = vmax.f32 %v419, %v420
    %v422 = vsub.f32 %v419, %v420
    %vm423 = vcmp.ne.f32.partialorder %v422, %v422
    %v424 = vadd.f32 %v419, %v420
    %v425 = vand.u32 2147483647, %v422
    %v426 = vsub.f32 0.0, %v425
    %v427 = vmul.f32 %v426, 1.442695
    %v428 = vpow.pop %v427
    %v429 = vadd.f32 %v428, 1.0
    %v430 = vlog2.pop %v429
    %v431 = vmul.f32 %v430, 0.6931472
    %v432 = vmul.f32 -0.5, %v428
    %v433 = vadd.f32 %v432, 1.0
    %v434 = vmul.f32 %v433, %v428
    %v435 = vand.u32 2147483647, %v428
    %vm436 = vcmp.lt.f32.partialorder %v435, 0.0004427343
    %v437 = vsel %vm436, %v434, %v431
    %v438 = vadd.f32 %v421, %v437
    %v439 = vsel %vm423, %v424, %v438
    %v440 = vsub.f32 %v219, %v439
    %vm441 = vcmask 8192
    %v442 = vsel %vm441, %v440, 0.0
    %443 = vadd.xlane.f32.xlu0 %v442
    %v444 = vpop.xlane.xlu0 %443
    %v445 = vsub.f32 0.0, %v444
    %vm446 = vcmask 0
    %447 = vst.msk [vmem:[#allocation12] sm:$0x1] %vm446, %v445
    // Predicated region
    $region50: #{topic_segment_forward.1} parent=1 // pred_check
      _
    $region51: #{topic_segment_forward.1} parent=1 // pred_check_branch
      %449 = sbr.rel (0) target = $region53
    $region52: #{topic_segment_forward.1} parent=1 // pred_region
      _
    $region53: #{topic_segment_forward.1} parent=1 // pred_fallthru
      _
    // Predicated region
    $region54: #{topic_segment_forward.1} parent=1 // pred_check
      _
    $region55: #{topic_segment_forward.1} parent=1 // pred_check_branch
      %451 = sbr.rel (0) target = $region57
    $region56: #{topic_segment_forward.1} parent=1 // pred_region
      %s453 = ssub.s32 16, 16
      %454 = vsyncadd [#allocation5], %s453
      %s456 = sshll.u32 [#allocation12], 4
      %s457 = int_to_ptr.vmem [resolvable:$true] %s456
      %459 = dma.vmem_to_hbm [thread:$0]  %s457, 16, %s9, [#allocation5]
    $region57: #{topic_segment_forward.1} parent=1 // pred_fallthru
      _
    // Predicated region
    $region58: #{topic_segment_forward.1} parent=1 // pred_check
      _
    $region59: #{topic_segment_forward.1} parent=1 // pred_check_branch
      %461 = sbr.rel (0) target = $region61
    $region60: #{topic_segment_forward.1} parent=1 // pred_region
      _
    $region61: #{topic_segment_forward.1} parent=1 // pred_fallthru
      _
    // Predicated region
    $region62: #{topic_segment_forward.1} parent=1 // pred_check
      _
    $region63: #{topic_segment_forward.1} parent=1 // pred_check_branch
      %463 = sbr.rel (0) target = $region65
    $region64: #{topic_segment_forward.1} parent=1 // pred_region
      %464 = dma.done [#allocation5], 16
    $region65: #{topic_segment_forward.1} parent=1 // pred_fallthru
      _
    %465 = vsyncpa [#allocation5], 1
    %466 = vsyncpa [#allocation6], 1
    %467 = vsyncpa [#allocation8], 1
    %468 = vsyncpa [#allocation11], 1

</llo_original>
